<compile_context>
chip_gen: v7x
topology: tpu7x:2x2x1
jax: 0.10.0
libtpu: 0.0.40
codegen_flags: <defaults>
</compile_context>

<pallas_src>
import functools

import jax
import jax.numpy as jnp
from jax import lax
from jax.experimental import pallas as pl
from jax.experimental.pallas import tpu as pltpu

EPS = 1e-12  # PyTorch spectral_norm default eps


def _round_up(x, m):
    return ((x + m - 1) // m) * m


# ---------------------------------------------------------------------------
# Kernel 1: one spectral-norm power iteration, sigma, weight scaling, u update.
# ---------------------------------------------------------------------------
def power_iter_kernel(w_ref, u_ref, ws_ref, u_out_ref):
    """w_ref  : (OC, Kp) f32 weight matrix (K zero-padded to Kp)
       u_ref  : (OC, 1)  f32 current left singular vector estimate
       ws_ref : (OC, Kp) output: W / sigma, in the GEMM feed dtype
       u_out_ref : (OC, 1) f32 output: updated u (PyTorch updates this buffer)"""
    w = w_ref[...]                                        # (OC, Kp)
    u = u_ref[...]                                        # (OC, 1)

    # v = normalize(W^T u)
    wtu = jnp.sum(w * u, axis=0, keepdims=True)           # (1, Kp)
    v = wtu / jnp.maximum(jnp.sqrt(jnp.sum(wtu * wtu)), EPS)

    # u_new = normalize(W v)
    wv = jnp.sum(w * v, axis=1, keepdims=True)            # (OC, 1)
    u_new = wv / jnp.maximum(jnp.sqrt(jnp.sum(wv * wv)), EPS)

    # sigma = u_new^T W v ; fold 1/sigma into the weight once (GEMM never divides).
    sigma = jnp.sum(u_new * wv)
    ws_ref[...] = (w * (1.0 / sigma)).astype(ws_ref.dtype)
    u_out_ref[...] = u_new


# ---------------------------------------------------------------------------
# Kernel 2: tiled conv-as-GEMM, lane-dense (OC, TSP) output tiles.
# ---------------------------------------------------------------------------
def snconv_gemm_kernel(p_ref, ws_ref, b_ref, o_ref):
    """p_ref : (Kp, TSP) K-major im2col patch tile (lane dim = spatial, 128-mult)
       ws_ref: (OC, Kp)  sigma-scaled weight (constant index map -> fetched once)
       b_ref : (OC, 1)   bias, f32
       o_ref : (OC, TSP) output tile (lane-dense, unmasked stores)"""
    acc = jnp.dot(ws_ref[...], p_ref[...],
                  preferred_element_type=jnp.float32)      # (OC, TSP) f32 accum
    o_ref[...] = (acc + b_ref[...]).astype(o_ref.dtype)


# ---------------------------------------------------------------------------
# Wrapper
# ---------------------------------------------------------------------------
def im2col_kmajor(x, kh, kw, stride, padding):
    """x: (N, C, H, W) -> patches (N, C*KH*KW, OH*OW), K-major / spatial-last.
    Column ordering (c-major, then kh, then kw) matches weight.view(OC, C*KH*KW)."""
    N, C, H, W = x.shape
    xp = jnp.pad(x, ((0, 0), (0, 0), (padding, padding), (padding, padding)))
    OH = (H + 2 * padding - kh) // stride + 1
    OW = (W + 2 * padding - kw) // stride + 1
    cols = []
    for i in range(kh):
        for j in range(kw):
            cols.append(xp[:, :, i:i + stride * OH:stride, j:j + stride * OW:stride])
    p = jnp.stack(cols, axis=2)                   # (N, C, KH*KW, OH, OW)
    p = p.reshape(N, C * kh * kw, OH * OW)        # c-major flattening, spatial last
    return p, OH, OW


@functools.partial(jax.jit, static_argnames=("stride", "padding", "tsp", "gemm_dtype"))
def spectral_norm_conv2d(x, weight, bias, u, stride=1, padding=0, tsp=4096,
                         gemm_dtype=jnp.bfloat16):
    """Forward of SpectralNormConv2d (training-mode: 1 power iteration,
    eps=1e-12, dim=0).  Returns (out_NCHW (f32), u_new)."""
    N, C, H, W = x.shape
    OC, _, KH, KW = weight.shape
    K = C * KH * KW

    # Cast BEFORE im2col so the (already slimmer) patch materialization pass is
    # done in the GEMM feed dtype.
    patches, OH, OW = im2col_kmajor(x.astype(gemm_dtype), KH, KW, stride, padding)
    OHW = OH * OW

    # K only needs sublane (8) alignment in K-major layout; spatial (lane) dim
    # is padded to the tile size. Zero padding changes neither sigma nor the GEMM.
    Kp = _round_up(K, 8)
    tsp_eff = max(128, min(_round_up(tsp, 128), _round_up(OHW, 128)))
    Sp = _round_up(OHW, tsp_eff)

    patches = jnp.pad(patches, ((0, 0), (0, Kp - K), (0, Sp - OHW)))
    w_mat = jnp.pad(weight.reshape(OC, K).astype(jnp.float32), ((0, 0), (0, Kp - K)))
    b = bias.reshape(OC, 1).astype(jnp.float32)
    u2 = u.reshape(OC, 1).astype(jnp.float32)

    # --- kernel 1: power iteration + sigma, run exactly once (f32 math) ------
    ws, u_new = pl.pallas_call(
        power_iter_kernel,
        out_shape=(jax.ShapeDtypeStruct((OC, Kp), gemm_dtype),
                   jax.ShapeDtypeStruct((OC, 1), jnp.float32)),
        in_specs=[pl.BlockSpec(memory_space=pltpu.MemorySpace.VMEM)] * 2,
        out_specs=(pl.BlockSpec(memory_space=pltpu.MemorySpace.VMEM),
                   pl.BlockSpec(memory_space=pltpu.MemorySpace.VMEM)),
    )(w_mat, u2)

    # --- kernel 2: pipelined GEMM over (batch, spatial tiles) ----------------
    bpe = jnp.dtype(gemm_dtype).itemsize
    footprint = (2 * Kp * tsp_eff * bpe        # double-buffered patch tile
                 + 2 * OC * tsp_eff * 4        # double-buffered out tile
                 + 2 * OC * Kp * bpe           # weight buffers
                 + 2 * OC * 4)                 # bias buffers
    vmem_limit = int(min(48 * 2**20, max(16 * 2**20, footprint + 8 * 2**20)))

    grid = (N, Sp // tsp_eff)
    out = pl.pallas_call(
        snconv_gemm_kernel,
        out_shape=jax.ShapeDtypeStruct((N, OC, Sp), jnp.float32),
        grid_spec=pltpu.PrefetchScalarGridSpec(
            num_scalar_prefetch=0,
            grid=grid,
            in_specs=[
                pl.BlockSpec((None, Kp, tsp_eff), lambda n, s: (n, 0, s)),  # patch tile
                pl.BlockSpec((OC, Kp), lambda n, s: (0, 0)),                # weight (resident)
                pl.BlockSpec((OC, 1), lambda n, s: (0, 0)),                 # bias (resident)
            ],
            out_specs=pl.BlockSpec((None, OC, tsp_eff), lambda n, s: (n, 0, s)),
        ),
        compiler_params=pltpu.CompilerParams(
            dimension_semantics=("parallel", "parallel"),   # megacore on v7x
            vmem_limit_bytes=vmem_limit,
        ),
    )(patches, ws, b)

    # N-major layout already; padded spatial columns (contain bias only) are
    # sliced off, then a free reshape to NCHW — no transpose pass.
    if Sp != OHW:
        out = out[:, :, :OHW]
    out = out.reshape(N, OC, OH, OW)
    return out, u_new.reshape(OC)


# ---------------------------------------------------------------------------
# Pure-JAX reference (same math) for a sanity check.
# ---------------------------------------------------------------------------
def _reference(x, weight, bias, u, stride, padding):
    OC = weight.shape[0]
    w_mat = weight.reshape(OC, -1)
    v = w_mat.T @ u
    v = v / jnp.maximum(jnp.linalg.norm(v), EPS)
    u_new = w_mat @ v
    u_new = u_new / jnp.maximum(jnp.linalg.norm(u_new), EPS)
    sigma = u_new @ (w_mat @ v)
    w_bar = weight / sigma
    out = lax.conv_general_dilated(
        x, w_bar, window_strides=(stride, stride),
        padding=[(padding, padding), (padding, padding)],
        dimension_numbers=("NCHW", "OIHW", "NCHW"))
    return out + bias.reshape(1, OC, 1, 1), u_new


if __name__ == "__main__":
    key = jax.random.PRNGKey(0)
    k_x, k_w, k_b, k_u = jax.random.split(key, 4)

    # Module config: SpectralNormConv2d(in_channels=4, out_channels=8,
    #                                   kernel_size=3, stride=1, padding=1)
    N, C, H, W = 2, 4, 16, 16
    OC, KH, KW = 8, 3, 3
    stride, padding = 1, 1

    x = jax.random.normal(k_x, (N, C, H, W), dtype=jnp.float32)
    weight = jax.random.normal(k_w, (OC, C, KH, KW), dtype=jnp.float32) * 0.1
    bias = jax.random.normal(k_b, (OC,), dtype=jnp.float32) * 0.1
    u0 = jax.random.normal(k_u, (OC,), dtype=jnp.float32)
    u0 = u0 / jnp.maximum(jnp.linalg.norm(u0), EPS)   # PyTorch-style u init

    ref_out, ref_u = _reference(x, weight, bias, u0, stride, padding)

    # f32 GEMM path with tsp=128 so the small test exercises a multi-step grid
    # (OH*OW = 256 -> 2 spatial tiles per batch); tight tolerance.
    out32, u32 = spectral_norm_conv2d(x, weight, bias, u0, stride=stride,
                                      padding=padding, tsp=128,
                                      gemm_dtype=jnp.float32)
    out32 = jax.block_until_ready(out32)
    assert out32.shape == (N, OC, H, W), out32.shape
    assert jnp.allclose(out32, ref_out, atol=1e-4, rtol=1e-4), \
        float(jnp.abs(out32 - ref_out).max())
    assert jnp.allclose(u32, ref_u, atol=1e-5, rtol=1e-5), \
        float(jnp.abs(u32 - ref_u).max())

    # Default path: bf16 MXU feed, f32 accumulation (looser tolerance expected);
    # power iteration / u stay f32 so u keeps the tight tolerance.
    out, u_new = spectral_norm_conv2d(x, weight, bias, u0, stride=stride,
                                      padding=padding)
    out = jax.block_until_ready(out)
    assert out.shape == (N, OC, H, W), out.shape
    assert jnp.allclose(out, ref_out, atol=5e-2, rtol=5e-2), \
        float(jnp.abs(out - ref_out).max())
    assert jnp.allclose(u_new, ref_u, atol=1e-5, rtol=1e-5), \
        float(jnp.abs(u_new - ref_u).max())

    print("KERNEL_OK")
</pallas_src>

<mosaic_0001>
module attributes {stable_mosaic.version = 11 : i64} {
  func.func @snconv_gemm_kernel(%arg0: i32, %arg1: i32, %arg2: memref<1x40x128xf32, #tpu.memory_space<vmem>>, %arg3: memref<8x40xf32, #tpu.memory_space<vmem>>, %arg4: memref<8x1xf32, #tpu.memory_space<vmem>>, %arg5: memref<1x8x128xf32, #tpu.memory_space<vmem>>) attributes {dimension_semantics = [#tpu.dimension_semantics<parallel>, #tpu.dimension_semantics<parallel>], iteration_bounds = array<i64: 2, 2>, scalar_prefetch = 0 : i64, scratch_operands = 0 : i64, tpu.core_type = #tpu.core_type<tc>, window_params = [{transform_indices = @transform_0, window_bounds = array<i64: 1, 40, 128>}, {pipeline_mode = #tpu.pipeline_mode<synchronous>, transform_indices = @transform_1, window_bounds = array<i64: 8, 40>}, {pipeline_mode = #tpu.pipeline_mode<synchronous>, transform_indices = @transform_2, window_bounds = array<i64: 8, 1>}, {transform_indices = @transform_3, window_bounds = array<i64: 1, 8, 128>}]} {
    %c0 = arith.constant 0 : index
    %c0_0 = arith.constant 0 : index
    %0 = vector.load %arg3[%c0, %c0_0] : memref<8x40xf32, #tpu.memory_space<vmem>>, vector<8x40xf32>
    %c0_1 = arith.constant 0 : index
    %c0_2 = arith.constant 0 : index
    %c0_3 = arith.constant 0 : index
    %1 = vector.load %arg2[%c0_1, %c0_2, %c0_3] : memref<1x40x128xf32, #tpu.memory_space<vmem>>, vector<1x40x128xf32>
    %2 = vector.shape_cast %1 : vector<1x40x128xf32> to vector<40x128xf32>
    %cst = arith.constant dense<0.000000e+00> : vector<8x128xf32>
    %3 = tpu.matmul %0, %2, %cst {dimension_numbers = #tpu.dot_dimension_numbers<[1], [0], [0], [1], [0, 0, 1, 1], [], []>} : vector<8x40xf32>, vector<40x128xf32>, vector<8x128xf32> -> vector<8x128xf32>
    %c0_4 = arith.constant 0 : index
    %c0_5 = arith.constant 0 : index
    %4 = vector.load %arg4[%c0_4, %c0_5] : memref<8x1xf32, #tpu.memory_space<vmem>>, vector<8x1xf32>
    %5 = vector.broadcast %4 : vector<8x1xf32> to vector<8x128xf32>
    %6 = arith.addf %3, %5 : vector<8x128xf32>
    %c0_6 = arith.constant 0 : index
    %c0_7 = arith.constant 0 : index
    %c0_8 = arith.constant 0 : index
    %7 = vector.load %arg5[%c0_6, %c0_7, %c0_8] : memref<1x8x128xf32, #tpu.memory_space<vmem>>, vector<1x8x128xf32>
    %8 = vector.shape_cast %7 : vector<1x8x128xf32> to vector<8x128xf32>
    %9 = vector.shape_cast %6 : vector<8x128xf32> to vector<1x8x128xf32>
    tpu.vector_store %arg5[%c0_6, %c0_7, %c0_8], %9 {strides = array<i32>} : memref<1x8x128xf32, #tpu.memory_space<vmem>>, vector<1x8x128xf32>,
    return
  }
  func.func @transform_0(%arg0: i32, %arg1: i32) -> (i32, i32, i32) {
    %c0_i32 = arith.constant 0 : i32
    %c0_i32_0 = arith.constant 0 : i32
    return %arg0, %c0_i32, %arg1 : i32, i32, i32
  }
  func.func @transform_1(%arg0: i32, %arg1: i32) -> (i32, i32) {
    %c0_i32 = arith.constant 0 : i32
    %c0_i32_0 = arith.constant 0 : i32
    %c0_i32_1 = arith.constant 0 : i32
    return %c0_i32, %c0_i32_0 : i32, i32
  }
  func.func @transform_2(%arg0: i32, %arg1: i32) -> (i32, i32) {
    %c0_i32 = arith.constant 0 : i32
    %c0_i32_0 = arith.constant 0 : i32
    %c0_i32_1 = arith.constant 0 : i32
    return %c0_i32, %c0_i32_0 : i32, i32
  }
  func.func @transform_3(%arg0: i32, %arg1: i32) -> (i32, i32, i32) {
    %c0_i32 = arith.constant 0 : i32
    %c0_i32_0 = arith.constant 0 : i32
    return %arg0, %c0_i32, %arg1 : i32, i32, i32
  }
}

module attributes {stable_mosaic.version = 11 : i64} {
  func.func @power_iter_kernel(%arg0: memref<8x40xf32, #tpu.memory_space<vmem>>, %arg1: memref<8x1xf32, #tpu.memory_space<vmem>>, %arg2: memref<8x40xf32, #tpu.memory_space<vmem>>, %arg3: memref<8x1xf32, #tpu.memory_space<vmem>>) attributes {dimension_semantics = [], scalar_prefetch = 0 : i64, scratch_operands = 0 : i64, tpu.core_type = #tpu.core_type<tc>} {
    %c0 = arith.constant 0 : index
    %c0_0 = arith.constant 0 : index
    %0 = vector.load %arg0[%c0, %c0_0] : memref<8x40xf32, #tpu.memory_space<vmem>>, vector<8x40xf32>
    %c0_1 = arith.constant 0 : index
    %c0_2 = arith.constant 0 : index
    %1 = vector.load %arg1[%c0_1, %c0_2] : memref<8x1xf32, #tpu.memory_space<vmem>>, vector<8x1xf32>
    %2 = vector.broadcast %1 : vector<8x1xf32> to vector<8x40xf32>
    %3 = arith.mulf %0, %2 : vector<8x40xf32>
    %cst = arith.constant dense<0.000000e+00> : vector<40xf32>
    %4 = vector.multi_reduction <add>, %3, %cst [0] : vector<8x40xf32> to vector<40xf32>
    %5 = vector.shape_cast %4 : vector<40xf32> to vector<1x40xf32>
    %6 = arith.mulf %5, %5 : vector<1x40xf32>
    %7 = vector.shape_cast %6 : vector<1x40xf32> to vector<1x1x40xf32>
    %cst_3 = arith.constant dense<0.000000e+00> : vector<1xf32>
    %8 = vector.multi_reduction <add>, %7, %cst_3 [1, 2] : vector<1x1x40xf32> to vector<1xf32>
    %9 = vector.shape_cast %8 : vector<1xf32> to vector<1x1x1xf32>
    %10 = vector.extract %9[0, 0, 0] : f32 from vector<1x1x1xf32>
    %11 = math.sqrt %10 : f32
    %cst_4 = arith.constant 9.99999996E-13 : f32
    %12 = arith.maximumf %11, %cst_4 : f32
    %13 = vector.broadcast %12 : f32 to vector<1x40xf32>
    %14 = arith.divf %5, %13 : vector<1x40xf32>
    %15 = vector.broadcast %14 : vector<1x40xf32> to vector<8x40xf32>
    %16 = arith.mulf %0, %15 : vector<8x40xf32>
    %cst_5 = arith.constant dense<0.000000e+00> : vector<8xf32>
    %17 = vector.multi_reduction <add>, %16, %cst_5 [1] : vector<8x40xf32> to vector<8xf32>
    %18 = vector.shape_cast %17 : vector<8xf32> to vector<8x1xf32>
    %19 = arith.mulf %18, %18 : vector<8x1xf32>
    %20 = vector.shape_cast %19 : vector<8x1xf32> to vector<1x8x1xf32>
    %cst_6 = arith.constant dense<0.000000e+00> : vector<1xf32>
    %21 = vector.multi_reduction <add>, %20, %cst_6 [1, 2] : vector<1x8x1xf32> to vector<1xf32>
    %22 = vector.shape_cast %21 : vector<1xf32> to vector<1x1x1xf32>
    %23 = vector.extract %22[0, 0, 0] : f32 from vector<1x1x1xf32>
    %24 = math.sqrt %23 : f32
    %cst_7 = arith.constant 9.99999996E-13 : f32
    %25 = arith.maximumf %24, %cst_7 : f32
    %26 = vector.broadcast %25 : f32 to vector<8x1xf32>
    %27 = arith.divf %18, %26 : vector<8x1xf32>
    %28 = arith.mulf %27, %18 : vector<8x1xf32>
    %29 = vector.shape_cast %28 : vector<8x1xf32> to vector<1x8x1xf32>
    %cst_8 = arith.constant dense<0.000000e+00> : vector<1xf32>
    %30 = vector.multi_reduction <add>, %29, %cst_8 [1, 2] : vector<1x8x1xf32> to vector<1xf32>
    %31 = vector.shape_cast %30 : vector<1xf32> to vector<1x1x1xf32>
    %32 = vector.extract %31[0, 0, 0] : f32 from vector<1x1x1xf32>
    %cst_9 = arith.constant 1.000000e+00 : f32
    %33 = arith.divf %cst_9, %32 : f32
    %34 = vector.broadcast %33 : f32 to vector<8x40xf32>
    %35 = arith.mulf %0, %34 : vector<8x40xf32>
    %c0_10 = arith.constant 0 : index
    %c0_11 = arith.constant 0 : index
    %36 = vector.load %arg2[%c0_10, %c0_11] : memref<8x40xf32, #tpu.memory_space<vmem>>, vector<8x40xf32>
    tpu.vector_store %arg2[%c0_10, %c0_11], %35 {strides = array<i32>} : memref<8x40xf32, #tpu.memory_space<vmem>>, vector<8x40xf32>,
    %c0_12 = arith.constant 0 : index
    %c0_13 = arith.constant 0 : index
    %37 = vector.load %arg3[%c0_12, %c0_13] : memref<8x1xf32, #tpu.memory_space<vmem>>, vector<8x1xf32>
    tpu.vector_store %arg3[%c0_12, %c0_13], %27 {strides = array<i32>} : memref<8x1xf32, #tpu.memory_space<vmem>>, vector<8x1xf32>,
    return
  }
}

</mosaic_0001>

<llo_original>
// kernel: spectral_norm_conv2d.2
$region0: #{spectral_norm_conv2d.2}
  #allocation0 [shape = 'u32[]', space=smem, size = 0x4, offset = 0x4, fixed_abs, tag = 'smem constant byte address 0x4 - core index']
  #allocation1 [shape = 'u32[144,128]{1,0:T(1,128)}', space=vmem, size = 0x12000, scoped, tag = 'internal scratch']
  %s0 = inlined_call_operand.vmem [shape: f32[8,40], index: 0, kind: input, shape index: {}]
  %s1 = inlined_call_operand.vmem [shape: f32[8,1], index: 1, kind: input, shape index: {}]
  %s2 = inlined_call_operand.vmem [shape: f32[8,40], index: 2, kind: output, shape index: {0}]
  %s3 = inlined_call_operand.vmem [shape: f32[8,1], index: 3, kind: output, shape index: {1}]
  %4 = xla_tuple %s2, %s3
  %s5 = sld [smem:[#allocation0]]
  $region26: #{spectral_norm_conv2d.2} parent=0
    _
  %s7 = ssub.s32 1, %s5
  %s8 = scalar_select 0, %s7, %s5
  // Predicated region
  $region2: #{spectral_norm_conv2d.2} parent=0 // pred_check
    _
  $region3: #{spectral_norm_conv2d.2} parent=0 // pred_check_branch
    %10 = sbr.rel (0) target = $region5
  $region4: #{spectral_norm_conv2d.2} parent=0 // pred_region
    _
  $region5: #{spectral_norm_conv2d.2} parent=0 // pred_fallthru
    _
  // Predicated region
  $region6: #{spectral_norm_conv2d.2} parent=0 // pred_check
    _
  $region7: #{spectral_norm_conv2d.2} parent=0 // pred_check_branch
    %12 = sbr.rel (0) target = $region9
  $region8: #{spectral_norm_conv2d.2} parent=0 // pred_region
    _
  $region9: #{spectral_norm_conv2d.2} parent=0 // pred_fallthru
    _
  %v13 = vld [vmem:[%s0] sm:$0xff]
  %v14 = vld [vmem:[%s1] sm:$0xff]
  %16 = vset.pattern.permute.xlu0 0
  %17 = vperm.xlu0 %16, %v14
  %v18 = vpop.permute.xlu0 %17
  %v20 = vmul.f32 %v13, %v18
  %vm21 = vcmask 326656
  %v22 = vsel %vm21, %v20, 0.0
  %v23 = vrot.slane %v22, 4
  %v24 = vadd.f32 %v22, %v23
  %v25 = vrot.slane %v24, 2
  %v26 = vadd.f32 %v24, %v25
  %v27 = vrot.slane %v26, 1
  %v28 = vadd.f32 %v26, %v27
  %v29 = vmul.f32 %v28, %v28
  %vm30 = vcmask 319488
  %v31 = vsel %vm30, %v29, 0.0
  %32 = vadd.xlane.f32.xlu0 %v31
  %v33 = vpop.xlane.xlu0 %32
  %v34 = vrot.slane %v33, 4
  %v35 = vadd.f32 %v33, %v34
  %v36 = vrot.slane %v35, 2
  %v37 = vadd.f32 %v35, %v36
  %v38 = vrot.slane %v37, 1
  %v39 = vadd.f32 %v37, %v38
  %s40 = vtos %v39
  %v41 = vstv %s40
  %v42 = vrsqrt.pop %v41
  %v43 = vmul.f32 %v41, %v42
  %vm44 = vcmp.eq.f32.partialorder %v41, inf
  %v45 = vsel %vm44, %v41, %v43
  %vm46 = vcmp.eq.f32.partialorder %v41, 0.0
  %v47 = vand.u32 %v41, 2147483648
  %v48 = vsel %vm46, %v47, %v45
  %s49 = vtos %v48
  %s50 = smax.f32 %s49, 1e-12
  %v51 = vstv %s50
  %v52 = vrcp.pop %v51
  %v53 = vmul.f32 %v28, %v52
  %v54 = vmul.f32 %v13, %v53
  %v55 = vsel %vm21, %v54, 0.0
  %56 = vadd.xlane.f32.xlu0 %v55
  %v57 = vpop.xlane.xlu0 %56
  %v58 = vmul.f32 %v57, %v57
  %vm59 = vcmask 7168
  %v60 = vsel %vm59, %v58, 0.0
  %61 = vadd.xlane.f32.xlu0 %v60
  %v62 = vpop.xlane.xlu0 %61
  %v63 = vrot.slane %v62, 4
  %v64 = vadd.f32 %v62, %v63
  %v65 = vrot.slane %v64, 2
  %v66 = vadd.f32 %v64, %v65
  %v67 = vrot.slane %v66, 1
  %v68 = vadd.f32 %v66, %v67
  %s69 = vtos %v68
  %v70 = vstv %s69
  %v71 = vrsqrt.pop %v70
  %v72 = vmul.f32 %v70, %v71
  %vm73 = vcmp.eq.f32.partialorder %v70, inf
  %v74 = vsel %vm73, %v70, %v72
  %vm75 = vcmp.eq.f32.partialorder %v70, 0.0
  %v76 = vand.u32 %v70, 2147483648
  %v77 = vsel %vm75, %v76, %v74
  %s78 = vtos %v77
  %s79 = smax.f32 %s78, 1e-12
  %v80 = vstv %s79
  %v81 = vrcp.pop %v80
  %v82 = vmul.f32 %v57, %v81
  %v83 = vmul.f32 %v82, %v57
  %v84 = vsel %vm59, %v83, 0.0
  %85 = vadd.xlane.f32.xlu0 %v84
  %v86 = vpop.xlane.xlu0 %85
  %v87 = vrot.slane %v86, 4
  %v88 = vadd.f32 %v86, %v87
  %v89 = vrot.slane %v88, 2
  %v90 = vadd.f32 %v88, %v89
  %v91 = vrot.slane %v90, 1
  %v92 = vadd.f32 %v90, %v91
  %s93 = vtos %v92
  %v94 = vstv %s93
  %v95 = vrcp.pop %v94
  %s96 = vtos %v95
  %v97 = vstv %s96
  %v98 = vmul.f32 %v13, %v97
  %99 = vst.msk [vmem:[%s2] sm:$0xff] %vm21, %v98
  %100 = vst.msk [vmem:[%s3] sm:$0xff] %vm59, %v82
  // Predicated region
  $region10: #{spectral_norm_conv2d.2} parent=0 // pred_check
    _
  $region11: #{spectral_norm_conv2d.2} parent=0 // pred_check_branch
    %102 = sbr.rel (0) target = $region13
  $region12: #{spectral_norm_conv2d.2} parent=0 // pred_region
    _
  $region13: #{spectral_norm_conv2d.2} parent=0 // pred_fallthru
    _
  // Predicated region
  $region14: #{spectral_norm_conv2d.2} parent=0 // pred_check
    _
  $region15: #{spectral_norm_conv2d.2} parent=0 // pred_check_branch
    %104 = sbr.rel (0) target = $region17
  $region16: #{spectral_norm_conv2d.2} parent=0 // pred_region
    _
  $region17: #{spectral_norm_conv2d.2} parent=0 // pred_fallthru
    _
  // Predicated region
  $region18: #{spectral_norm_conv2d.2} parent=0 // pred_check
    _
  $region19: #{spectral_norm_conv2d.2} parent=0 // pred_check_branch
    %106 = sbr.rel (0) target = $region21
  $region20: #{spectral_norm_conv2d.2} parent=0 // pred_region
    _
  $region21: #{spectral_norm_conv2d.2} parent=0 // pred_fallthru
    _
  // Predicated region
  $region22: #{spectral_norm_conv2d.2} parent=0 // pred_check
    _
  $region23: #{spectral_norm_conv2d.2} parent=0 // pred_check_branch
    %108 = sbr.rel (0) target = $region25
  $region24: #{spectral_norm_conv2d.2} parent=0 // pred_region
    _
  $region25: #{spectral_norm_conv2d.2} parent=0 // pred_fallthru
    _

// kernel: spectral_norm_conv2d.3
$region0: #{spectral_norm_conv2d.3}
  #allocation0 [shape = 'u32[]', space=smem, size = 0x4, offset = 0x4, fixed_abs, tag = 'smem constant byte address 0x4 - core index']
  #allocation1 [shape = 'u32[144,128]{1,0:T(1,128)}', space=vmem, size = 0x12000, scoped, tag = 'internal scratch']
  %s0 = inlined_call_operand.vmem [shape: f32[2,40,256], index: 0, kind: input, shape index: {}]
  %s1 = inlined_call_operand.vmem [shape: f32[8,40], index: 1, kind: input, shape index: {}]
  %s2 = inlined_call_operand.vmem [shape: f32[8,1], index: 2, kind: input, shape index: {}]
  %s3 = inlined_call_operand.vmem [shape: f32[2,8,256], index: 3, kind: output, shape index: {}]
  %s4 = sld [smem:[#allocation0]]
  $region83: #{spectral_norm_conv2d.3} parent=0
    _
  %s6 = ssub.s32 1, %s4
  %s7 = scalar_select 0, %s6, %s4
  $region1: #{spectral_norm_conv2d.3} parent=0
    #allocation2 [shape = 'u8[40960]{0}', space=vmem, size = 0xa000, scoped, tag = 'input window, operand 0']
    loop: start=0, step=1, limit=6
    $region2: #{spectral_norm_conv2d.3} parent=1 // loop_pre_header
      _
    $region3: #{spectral_norm_conv2d.3} parent=1 // loop_header
      %s9 = sphi 0, %s13
      %p10 = scmp.ge.s32.totalorder %s9, 6
      %s16 = sphi 0, %s28
      %s17 = sphi 0, %s24
      %s18 = sphi 0, %s16
      %s19 = sphi 0, %s17
      %s20 = sphi 0, %s18
      %s21 = sphi 0, %s19
      %s33 = sphi 0, %s35
      %s36 = sphi 0, %s33
      %s37 = sphi 0, %s36
      %s53 = sphi 0, %s37
      %s57 = sphi 0, %s57
      %s59 = sphi 0, %s57
      %s60 = sphi 0, %s59
      %s74 = sphi 0, %s60
      %s78 = sphi 0, %s78
      %s80 = sphi 0, %s78
      %s81 = sphi 0, %s80
      %s95 = sphi 0, %s81
      %s103 = sphi 0, %s105
      %s106 = sphi 0, %s103
      %s107 = sphi 0, %s106
      %s123 = sphi 0, %s107
    $region4: #{spectral_norm_conv2d.3} parent=1 // loop_header_branch
      %12 = sbr.rel (%p10) target = $region8
    $region5: #{spectral_norm_conv2d.3} parent=1 // loop_body
      %s14 = ssub.s32 %s9, 1
      %s15 = ssub.s32 %s9, 2
      %s22 = sadd.s32 1, %s17
      %p23 = scmp.ge.s32.totalorder %s22, 2
      %s24 = scalar_select %p23, 0, %s22
      %s25 = sadd.s32 1, %s16
      %s26 = scalar_select %p23, %s25, %s16
      %p27 = scmp.ge.s32.totalorder %s26, 2
      %s28 = scalar_select %p27, 0, %s26
      %s29 = ssub.s32 %s16, %s28
      %s30 = ssub.s32 %s17, %s24
      %s31 = sor.u32 %s29, %s30
      %p32 = scmp.eq.s32.totalorder %s31, 0
      %s34 = sadd.s32 %s33, 1
      %s35 = scalar_select %p32, %s33, %s34
      %p38 = pneg %p32
      %p39 = scmp.eq.s32.totalorder %s9, 3
      %p40 = por %p38, %p39
      %p41 = scmp.ne.s32.totalorder %s33, %s36
      %p42 = scmp.eq.s32.totalorder %s9, 0
      %p43 = por %p41, %p42
      %p44 = scmp.ne.s32.totalorder %s33, %s36
      %p45 = scmp.eq.s32.totalorder %s14, 3
      %p46 = por %p44, %p45
      %p47 = scmp.ne.s32.totalorder %s36, %s37
      %p48 = scmp.eq.s32.totalorder %s14, 0
      %p49 = por %p47, %p48
      %p50 = scmp.ne.s32.totalorder %s36, %s37
      %p51 = scmp.eq.s32.totalorder %s15, 3
      %p52 = por %p50, %p51
      %p54 = scmp.ne.s32.totalorder %s37, %s53
      %p55 = scmp.eq.s32.totalorder %s15, 0
      %p56 = por %p54, %p55
      %s58 = sadd.s32 %s57, 1
      %p61 = scmp.eq.s32.totalorder %s9, 3
      %p62 = scmp.ne.s32.totalorder %s57, %s59
      %p63 = scmp.eq.s32.totalorder %s9, 0
      %p64 = por %p62, %p63
      %p65 = scmp.ne.s32.totalorder %s57, %s59
      %p66 = scmp.eq.s32.totalorder %s14, 3
      %p67 = por %p65, %p66
      %p68 = scmp.ne.s32.totalorder %s59, %s60
      %p69 = scmp.eq.s32.totalorder %s14, 0
      %p70 = por %p68, %p69
      %p71 = scmp.ne.s32.totalorder %s59, %s60
      %p72 = scmp.eq.s32.totalorder %s15, 3
      %p73 = por %p71, %p72
      %p75 = scmp.ne.s32.totalorder %s60, %s74
      %p76 = scmp.eq.s32.totalorder %s15, 0
      %p77 = por %p75, %p76
      %s79 = sadd.s32 %s78, 1
      %p82 = scmp.eq.s32.totalorder %s9, 3
      %p83 = scmp.ne.s32.totalorder %s78, %s80
      %p84 = scmp.eq.s32.totalorder %s9, 0
      %p85 = por %p83, %p84
      %p86 = scmp.ne.s32.totalorder %s78, %s80
      %p87 = scmp.eq.s32.totalorder %s14, 3
      %p88 = por %p86, %p87
      %p89 = scmp.ne.s32.totalorder %s80, %s81
      %p90 = scmp.eq.s32.totalorder %s14, 0
      %p91 = por %p89, %p90
      %p92 = scmp.ne.s32.totalorder %s80, %s81
      %p93 = scmp.eq.s32.totalorder %s15, 3
      %p94 = por %p92, %p93
      %p96 = scmp.ne.s32.totalorder %s81, %s95
      %p97 = scmp.eq.s32.totalorder %s15, 0
      %p98 = por %p96, %p97
      %s99 = ssub.s32 %s16, %s28
      %s100 = ssub.s32 %s17, %s24
      %s101 = sor.u32 %s99, %s100
      %p102 = scmp.eq.s32.totalorder %s101, 0
      %s104 = sadd.s32 %s103, 1
      %s105 = scalar_select %p102, %s103, %s104
      %p108 = pneg %p102
      %p109 = scmp.eq.s32.totalorder %s9, 3
      %p110 = por %p108, %p109
      %p111 = scmp.ne.s32.totalorder %s103, %s106
      %p112 = scmp.eq.s32.totalorder %s9, 0
      %p113 = por %p111, %p112
      %p114 = scmp.ne.s32.totalorder %s103, %s106
      %p115 = scmp.eq.s32.totalorder %s14, 3
      %p116 = por %p114, %p115
      %p117 = scmp.ne.s32.totalorder %s106, %s107
      %p118 = scmp.eq.s32.totalorder %s14, 0
      %p119 = por %p117, %p118
      %p120 = scmp.ne.s32.totalorder %s106, %s107
      %p121 = scmp.eq.s32.totalorder %s15, 3
      %p122 = por %p120, %p121
      %p124 = scmp.ne.s32.totalorder %s107, %s123
      %p125 = scmp.eq.s32.totalorder %s15, 0
      %p126 = por %p124, %p125
      %p127 = scmp.le.s32.totalorder 1, %s9
      %p128 = scmp.lt.s32.totalorder %s9, 5
      %p129 = pnand %p127, %p128
      %p130 = pneg %p129
      // Predicated region
      $region9: #{spectral_norm_conv2d.3} parent=5 // pred_check
        _
      $region10: #{spectral_norm_conv2d.3} parent=5 // pred_check_branch
        %132 = sbr.rel (%p129) target = $region12
      $region11: #{spectral_norm_conv2d.3} parent=5 // pred_region
        %s133 = ssub.s32 %s9, 1
        // Predicated region
        $region13: #{spectral_norm_conv2d.3} parent=11 // pred_check
          %p134 = pneg %p70
        $region14: #{spectral_norm_conv2d.3} parent=11 // pred_check_branch
          %136 = sbr.rel (%p134) target = $region16
        $region15: #{spectral_norm_conv2d.3} parent=11 // pred_region
          _
        $region16: #{spectral_norm_conv2d.3} parent=11 // pred_fallthru
          _
        // Predicated region
        $region17: #{spectral_norm_conv2d.3} parent=11 // pred_check
          %p137 = pneg %p91
        $region18: #{spectral_norm_conv2d.3} parent=11 // pred_check_branch
          %139 = sbr.rel (%p137) target = $region20
        $region19: #{spectral_norm_conv2d.3} parent=11 // pred_region
          _
        $region20: #{spectral_norm_conv2d.3} parent=11 // pred_fallthru
          _
      $region12: #{spectral_norm_conv2d.3} parent=5 // pred_fallthru
        _
      %p140 = scmp.lt.s32.totalorder %s9, 4
      // Predicated region
      $region21: #{spectral_norm_conv2d.3} parent=5 // pred_check
        %p141 = pneg %p140
      $region22: #{spectral_norm_conv2d.3} parent=5 // pred_check_branch
        %143 = sbr.rel (%p141) target = $region24
      $region23: #{spectral_norm_conv2d.3} parent=5 // pred_region
        // Predicated region
        $region25: #{spectral_norm_conv2d.3} parent=23 // pred_check
          %p144 = pneg %p43
        $region26: #{spectral_norm_conv2d.3} parent=23 // pred_check_branch
          %146 = sbr.rel (%p144) target = $region28
        $region27: #{spectral_norm_conv2d.3} parent=23 // pred_region
          %s147 = sand.u32 %s33, 1
          %s148 = sand.u32 %s33, 1
          %s149 = smul.addr %s148, 40
          %s150 = scalar_lea.vmem [#allocation2], %s149
          %s151 = smul.addr %s16, 10
          %s152 = sadd.s32 %s17, %s151
          %s153 = smul.addr %s152, 8
          %s154 = scalar_lea.vmem %s0, %s153
          // Predicated region
          $region29: #{spectral_norm_conv2d.3} parent=27 // pred_check
            _
          $region30: #{spectral_norm_conv2d.3} parent=27 // pred_check_branch
            %156 = sbr.rel (0) target = $region32
          $region31: #{spectral_norm_conv2d.3} parent=27 // pred_region
            // Predicated region
            $region33: #{spectral_norm_conv2d.3} parent=31 // pred_check
              _
            $region34: #{spectral_norm_conv2d.3} parent=31 // pred_check_branch
              %158 = sbr.rel (0) target = $region36
            $region35: #{spectral_norm_conv2d.3} parent=31 // pred_region
              // Predicated region
              $region48: #{spectral_norm_conv2d.3} parent=35 // pred_check
                _
              $region49: #{spectral_norm_conv2d.3} parent=35 // pred_check_branch
                %181 = sbr.rel (0) target = $region51
              $region50: #{spectral_norm_conv2d.3} parent=35 // pred_region
                loop: start=0, step=1, limit=1
                $region52: #{spectral_norm_conv2d.3} parent=50 // loop_pre_header
                  _
                $region53: #{spectral_norm_conv2d.3} parent=50 // loop_header
                  %s183 = sphi 0, %s187
                  %p184 = scmp.ge.s32.totalorder %s183, 1
                  %s188 = sphi %s154, %s154
                  %s189 = sphi %s150, %s150
                $region54: #{spectral_norm_conv2d.3} parent=50 // loop_header_branch
                  %186 = sbr.rel (%p184) target = $region58
                $region55: #{spectral_norm_conv2d.3} parent=50 // loop_body
                  %v190 = vld [vmem:[%s188] sm:$0xff]
                  %191 = vst [vmem:[%s189] sm:$0xff] %v190
                  %v192 = vld [vmem:[%s188 + $0x10] sm:$0xff]
                  %193 = vst [vmem:[%s189 + $0x8] sm:$0xff] %v192
                  %v194 = vld [vmem:[%s188 + $0x20] sm:$0xff]
                  %195 = vst [vmem:[%s189 + $0x10] sm:$0xff] %v194
                  %v196 = vld [vmem:[%s188 + $0x30] sm:$0xff]
                  %197 = vst [vmem:[%s189 + $0x18] sm:$0xff] %v196
                  %v198 = vld [vmem:[%s188 + $0x40] sm:$0xff]
                  %199 = vst [vmem:[%s189 + $0x20] sm:$0xff] %v198
                $region56: #{spectral_norm_conv2d.3} parent=50 // loop_footer
                  %s187 = sadd.s32 1, %s183
                $region57: #{spectral_norm_conv2d.3} parent=50 // loop_footer_branch
                  %182 = sbr.rel target = $region53
                $region58: #{spectral_norm_conv2d.3} parent=50 // loop_exit
                  _
              $region51: #{spectral_norm_conv2d.3} parent=35 // pred_fallthru
                _
              // Predicated region
              $region59: #{spectral_norm_conv2d.3} parent=35 // pred_check
                _
              $region60: #{spectral_norm_conv2d.3} parent=35 // pred_check_branch
                %201 = sbr.rel target = $region62
              $region61: #{spectral_norm_conv2d.3} parent=35 // pred_region
                _
              $region62: #{spectral_norm_conv2d.3} parent=35 // pred_fallthru
                _
            $region36: #{spectral_norm_conv2d.3} parent=31 // pred_fallthru
              _
            // Predicated region
            $region37: #{spectral_norm_conv2d.3} parent=31 // pred_check
              _
            $region38: #{spectral_norm_conv2d.3} parent=31 // pred_check_branch
              %160 = sbr.rel target = $region40
            $region39: #{spectral_norm_conv2d.3} parent=31 // pred_region
              loop: start=0, step=1, limit=1
              $region41: #{spectral_norm_conv2d.3} parent=39 // loop_pre_header
                _
              $region42: #{spectral_norm_conv2d.3} parent=39 // loop_header
                %s163 = sphi 0, %s167
                %p164 = scmp.ge.s32.totalorder %s163, 1
                %s168 = sphi %s154, %s154
                %s169 = sphi %s150, %s150
              $region43: #{spectral_norm_conv2d.3} parent=39 // loop_header_branch
                %166 = sbr.rel (%p164) target = $region47
              $region44: #{spectral_norm_conv2d.3} parent=39 // loop_body
                %v170 = vld [vmem:[%s168] sm:$0xff]
                %171 = vst [vmem:[%s169] sm:$0xff] %v170
                %v172 = vld [vmem:[%s168 + $0x10] sm:$0xff]
                %173 = vst [vmem:[%s169 + $0x8] sm:$0xff] %v172
                %v174 = vld [vmem:[%s168 + $0x20] sm:$0xff]
                %175 = vst [vmem:[%s169 + $0x10] sm:$0xff] %v174
                %v176 = vld [vmem:[%s168 + $0x30] sm:$0xff]
                %177 = vst [vmem:[%s169 + $0x18] sm:$0xff] %v176
                %v178 = vld [vmem:[%s168 + $0x40] sm:$0xff]
                %179 = vst [vmem:[%s169 + $0x20] sm:$0xff] %v178
              $region45: #{spectral_norm_conv2d.3} parent=39 // loop_footer
                %s167 = sadd.s32 1, %s163
              $region46: #{spectral_norm_conv2d.3} parent=39 // loop_footer_branch
                %162 = sbr.rel target = $region42
              $region47: #{spectral_norm_conv2d.3} parent=39 // loop_exit
                _
            $region40: #{spectral_norm_conv2d.3} parent=31 // pred_fallthru
              _
          $region32: #{spectral_norm_conv2d.3} parent=27 // pred_fallthru
            _
          %202 = vnop
        $region28: #{spectral_norm_conv2d.3} parent=23 // pred_fallthru
          _
      $region24: #{spectral_norm_conv2d.3} parent=5 // pred_fallthru
        _
      %p203 = scmp.le.s32.totalorder 1, %s9
      %p204 = scmp.lt.s32.totalorder %s9, 5
      %p205 = pnand %p203, %p204
      %p206 = pneg %p205
      // Predicated region
      $region63: #{spectral_norm_conv2d.3} parent=5 // pred_check
        _
      $region64: #{spectral_norm_conv2d.3} parent=5 // pred_check_branch
        %208 = sbr.rel (%p205) target = $region66
      $region65: #{spectral_norm_conv2d.3} parent=5 // pred_region
        %s209 = ssub.s32 %s9, 1
        %s210 = sand.u32 %s36, 1
        %s211 = sand.u32 %s36, 1
        %s212 = smul.addr %s211, 40
        %s213 = scalar_lea.vmem [#allocation2], %s212
        // Predicated region
        $region67: #{spectral_norm_conv2d.3} parent=65 // pred_check
          %p214 = pneg %p49
        $region68: #{spectral_norm_conv2d.3} parent=65 // pred_check_branch
          %216 = sbr.rel (%p214) target = $region70
        $region69: #{spectral_norm_conv2d.3} parent=65 // pred_region
          _
        $region70: #{spectral_norm_conv2d.3} parent=65 // pred_fallthru
          _
        %s217 = sand.u32 %s36, 1
        %s218 = sand.u32 %s36, 1
        %s219 = smul.addr %s218, 40
        %s220 = scalar_lea.vmem [#allocation2], %s219
        %p221 = pneg %p49
        %p222 = pneg %p46
        %p223 = pneg %p70
        %p224 = pneg %p67
        %p225 = pneg %p91
        %p226 = pneg %p88
        %p227 = pneg %p119
        %p228 = pneg %p116
        %p229 = scmp.lt.s32.totalorder %s18, 1
        %s230 = scalar_select %p229, %s18, 1
        %p231 = scmp.lt.s32.totalorder %s19, 1
        %s232 = scalar_select %p231, %s19, 1
        %s233 = smul.addr %s230, 2
        %s234 = sadd.s32 %s232, %s233
        %s235 = smul.addr %s234, 8
        %s236 = scalar_lea.vmem %s3, %s235
        %p237 = scmp.lt.s32.totalorder %s18, 1
        %s238 = scalar_select %p237, %s18, 1
        %p239 = scmp.lt.s32.totalorder %s19, 1
        %s240 = scalar_select %p239, %s19, 1
        %s241 = smul.addr %s238, 2
        %s242 = sadd.s32 %s240, %s241
        %s243 = smul.addr %s242, 8
        %s244 = scalar_lea.vmem %s3, %s243
        %v245 = vld [vmem:[%s1] sm:$0xff]
        %v246 = vld [vmem:[%s213] sm:$0xff]
        %v247 = vld [vmem:[%s213 + $0x8] sm:$0xff]
        %v248 = vld [vmem:[%s213 + $0x10] sm:$0xff]
        %v249 = vld [vmem:[%s213 + $0x18] sm:$0xff]
        %v250 = vld [vmem:[%s213 + $0x20] sm:$0xff]
        %v251 = vld [vmem:[%s2] sm:$0xff]
        %253 = vset.pattern.permute.xlu0 0
        %254 = vperm.xlu0 %253, %v251
        %v255 = vpop.permute.xlu0 %254
        %vm257 = vcmask 326656
        %v259 = vsel %vm257, %v245, 0
        %261 = vmatprep.subr.mxu0 0.0
        %262 = vmatpush1.msra.mxu0 %v246
        %263 = vmatprep.subr.mxu0 0.0
        %264 = vmatpush1.msra.mxu0 %v247
        %265 = vmatprep.subr.mxu0 0.0
        %266 = vmatpush1.msra.mxu0 %v248
        %267 = vmatprep.subr.mxu0 0.0
        %268 = vmatpush1.msra.mxu0 %v249
        %269 = vmatprep.subr.mxu0 0.0
        %270 = vmatpush1.msra.mxu0 %v250
        %271 = vmatprep.subr.mxu0 0.0
        %272 = vmatpush1.msra.mxu0 0.0
        %273 = vmatprep.subr.mxu0 0.0
        %274 = vmatpush1.msra.mxu0 0.0
        %275 = vmatprep.subr.mxu0 0.0
        %276 = vmatpush1.msra.mxu0 0.0
        %277 = vmatprep.subr.mxu0 0.0
        %278 = vmatpush1.msra.mxu0 0.0
        %279 = vmatprep.subr.mxu0 0.0
        %280 = vmatpush1.msra.mxu0 0.0
        %281 = vmatprep.subr.mxu0 0.0
        %282 = vmatpush1.msra.mxu0 0.0
        %283 = vmatprep.subr.mxu0 0.0
        %284 = vmatpush1.msra.mxu0 0.0
        %285 = vmatprep.subr.mxu0 0.0
        %286 = vmatpush1.msra.mxu0 0.0
        %287 = vmatprep.subr.mxu0 0.0
        %288 = vmatpush1.msra.mxu0 0.0
        %289 = vmatprep.subr.mxu0 0.0
        %290 = vmatpush1.msra.mxu0 0.0
        %291 = vmatprep.subr.mxu0 0.0
        %292 = vmatpush1.msra.mxu0 0.0
        %293 = vmatprep.subr.mxu0 0.0
        %294 = vmatpush1.msra.mxu0 0.0
        %295 = vmatprep.subr.mxu0 0.0
        %296 = vmatpush1.msra.mxu0 0.0
        %297 = vmatprep.subr.mxu0 0.0
        %298 = vmatpush1.msra.mxu0 0.0
        %299 = vmatprep.subr.mxu0 0.0
        %300 = vmatpush1.msra.mxu0 0.0
        %301 = vmatprep.subr.mxu0 0.0
        %302 = vmatpush1.msra.mxu0 0.0
        %303 = vmatprep.subr.mxu0 0.0
        %304 = vmatpush1.msra.mxu0 0.0
        %305 = vmatprep.subr.mxu0 0.0
        %306 = vmatpush1.msra.mxu0 0.0
        %307 = vmatprep.subr.mxu0 0.0
        %308 = vmatpush1.msra.mxu0 0.0
        %309 = vmatprep.subr.mxu0 0.0
        %310 = vmatpush1.msra.mxu0 0.0
        %311 = vmatprep.subr.mxu0 0.0
        %312 = vmatpush1.msra.mxu0 0.0
        %313 = vmatprep.subr.mxu0 0.0
        %314 = vmatpush1.msra.mxu0 0.0
        %315 = vmatprep.subr.mxu0 0.0
        %316 = vmatpush1.msra.mxu0 0.0
        %317 = vmatprep.subr.mxu0 0.0
        %318 = vmatpush1.msra.mxu0 0.0
        %319 = vmatprep.subr.mxu0 0.0
        %320 = vmatpush1.msra.mxu0 0.0
        %321 = vmatprep.subr.mxu0 0.0
        %322 = vmatpush1.msra.mxu0 0.0
        %323 = vmatprep.subr.mxu0 0.0
        %324 = vmatpush1.msra.mxu0 0.0
        %325 = vmatprep.mubr.f32.mxu0 0.0
        %326 = vmatmul.mubr.f32.gmra.mrb[0].mxu0 %v259
        %v327 = vpop.f32.mrb[0].mxu0
        %v328 = vadd.f32 %v255, %v327
        %v329 = vpop.f32.mrb[0].mxu0
        %330 = vdwg.mxu0
        %331 = vst [vmem:[%s244] sm:$0xff] %v328
        %p332 = scmp.lt.s32.totalorder %s18, 1
        %s333 = scalar_select %p332, %s18, 1
        %p334 = scmp.lt.s32.totalorder %s19, 1
        %s335 = scalar_select %p334, %s19, 1
        %s336 = smul.addr %s333, 2
        %s337 = sadd.s32 %s335, %s336
        %s338 = smul.addr %s337, 8
        %s339 = scalar_lea.vmem %s3, %s338
        // Predicated region
        $region71: #{spectral_norm_conv2d.3} parent=65 // pred_check
          %p340 = pneg %p116
        $region72: #{spectral_norm_conv2d.3} parent=65 // pred_check_branch
          %342 = sbr.rel (%p340) target = $region74
        $region73: #{spectral_norm_conv2d.3} parent=65 // pred_region
          _
        $region74: #{spectral_norm_conv2d.3} parent=65 // pred_fallthru
          _
      $region66: #{spectral_norm_conv2d.3} parent=5 // pred_fallthru
        _
      %p343 = scmp.le.s32.totalorder 2, %s9
      // Predicated region
      $region75: #{spectral_norm_conv2d.3} parent=5 // pred_check
        %p344 = pneg %p343
      $region76: #{spectral_norm_conv2d.3} parent=5 // pred_check_branch
        %346 = sbr.rel (%p344) target = $region78
      $region77: #{spectral_norm_conv2d.3} parent=5 // pred_region
        %s347 = ssub.s32 %s9, 2
        // Predicated region
        $region79: #{spectral_norm_conv2d.3} parent=77 // pred_check
          %p348 = pneg %p122
        $region80: #{spectral_norm_conv2d.3} parent=77 // pred_check_branch
          %350 = sbr.rel (%p348) target = $region82
        $region81: #{spectral_norm_conv2d.3} parent=77 // pred_region
          %p351 = scmp.lt.s32.totalorder %s20, 1
          %s352 = scalar_select %p351, %s20, 1
          %p353 = scmp.lt.s32.totalorder %s21, 1
          %s354 = scalar_select %p353, %s21, 1
          %s355 = smul.addr %s352, 2
          %s356 = sadd.s32 %s354, %s355
          %s357 = smul.addr %s356, 8
          %s358 = scalar_lea.vmem %s3, %s357
        $region82: #{spectral_norm_conv2d.3} parent=77 // pred_fallthru
          _
      $region78: #{spectral_norm_conv2d.3} parent=5 // pred_fallthru
        _
    $region6: #{spectral_norm_conv2d.3} parent=1 // loop_footer
      %s13 = sadd.s32 1, %s9
    $region7: #{spectral_norm_conv2d.3} parent=1 // loop_footer_branch
      %8 = sbr.rel target = $region3
    $region8: #{spectral_norm_conv2d.3} parent=1 // loop_exit
      _

</llo_original>
